<compile_context>
chip_gen: v7x
topology: tpu7x:2x2x1
jax: 0.10.0
libtpu: 0.0.40
codegen_flags: <defaults>
</compile_context>

<pallas_src>
import functools

import jax
import jax.numpy as jnp
from jax.experimental import pallas as pl
from jax.experimental.pallas import tpu as pltpu


def _bce_dice_kernel(pw_ref, logits_ref, tgt_ref, out_ref,
                     bce_acc, inter_acc, z_acc, y_acc,
                     *, n_valid_rows, row_tile, needs_mask):
    """Accumulate BCE sum and channel-0 sigmoid-dice sums for one batch element.

    pw_ref     : (1,) f32 SMEM       scalar-prefetch pos_weight
    logits_ref : (C, R, L)           logits tile (HBM dtype, upcast in-kernel)
    tgt_ref    : (C, R, L)           target tile
    out_ref    : (4, 8, 128) f32     per-batch partials [bce, intersect, z, y]
                                     (each value broadcast over an (8,128) tile)
    *_acc      : (R, L) f32 VMEM     vector accumulators (persist over pixel axis)
    """
    t = pl.program_id(1)
    last_t = pl.num_programs(1) - 1

    @pl.when(t == 0)
    def _():
        bce_acc[...] = jnp.zeros_like(bce_acc)
        inter_acc[...] = jnp.zeros_like(inter_acc)
        z_acc[...] = jnp.zeros_like(z_acc)
        y_acc[...] = jnp.zeros_like(y_acc)

    pos_weight = pw_ref[0]
    x = logits_ref[...].astype(jnp.float32)   # (C, R, L)
    y = tgt_ref[...].astype(jnp.float32)      # (C, R, L)

    def accumulate(row_mask):
        # BCEWithLogits (numerically stable, one exp + one log per element):
        #   softplus(x)  = max(x, 0) + log(1 + exp(-|x|))
        #   softplus(-x) = softplus(x) - x
        #   l = pw*y*softplus(-x) + (1-y)*softplus(x)
        #     = softplus(x) * (pw*y + 1 - y) - pw*y*x
        e = jnp.exp(-jnp.abs(x))
        sp = jnp.maximum(x, 0.0) + jnp.log(1.0 + e)
        l = sp * (pos_weight * y + (1.0 - y)) - pos_weight * (y * x)

        # Channel-0 sigmoid reusing e = exp(-|x|) (no second EUP exp):
        #   x >= 0: sigmoid = 1/(1+e);   x < 0: sigmoid = e/(1+e)
        x0 = x[0]
        t0 = y[0]
        e0 = e[0]
        d = 1.0 + e0
        r = pl.reciprocal(d, approx=True)
        r = r * (2.0 - d * r)                    # one Newton step -> ~f32 accuracy
        p0 = jnp.where(x0 >= 0.0, r, e0 * r)

        pi = p0 * t0
        pz = p0 * p0
        py = t0 * t0
        if row_mask is not None:                 # only traced for the tail tile
            l = jnp.where(row_mask[None], l, 0.0)
            pi = jnp.where(row_mask, pi, 0.0)
            pz = jnp.where(row_mask, pz, 0.0)
            py = jnp.where(row_mask, py, 0.0)

        bce_acc[...] += jnp.sum(l, axis=0)       # leading-axis add: cheap VPU
        inter_acc[...] += pi
        z_acc[...] += pz
        y_acc[...] += py

    if needs_mask:
        # Only the very last pixel tile overruns; keep mask work off hot tiles.
        @pl.when(t < last_t)
        def _():
            accumulate(None)

        @pl.when(t == last_t)
        def _():
            row = jax.lax.broadcasted_iota(jnp.int32, bce_acc.shape, 0)
            accumulate((t * row_tile + row) < n_valid_rows)
    else:
        accumulate(None)

    @pl.when(t == last_t)
    def _():
        tile = out_ref.shape[1:]
        out_ref[0] = jnp.full(tile, jnp.sum(bce_acc[...]), jnp.float32)
        out_ref[1] = jnp.full(tile, jnp.sum(inter_acc[...]), jnp.float32)
        out_ref[2] = jnp.full(tile, jnp.sum(z_acc[...]), jnp.float32)
        out_ref[3] = jnp.full(tile, jnp.sum(y_acc[...]), jnp.float32)


def _boundary_count_kernel(tgt_ref, th_ref, tw_ref, out_ref):
    """Boundary (C) and foreground (S) counts on channel 0, summed over batch.

    tgt_ref : (H, W)       channel-0 target plane of one batch element
    th_ref  : (H, H) bf16  tridiagonal ones (vertical 3-sum)
    tw_ref  : (W, W) bf16  tridiagonal ones (horizontal 3-sum)
    out_ref : (2,) f32 SMEM  [C, S], accumulated over the batch grid
    """
    b = pl.program_id(0)

    @pl.when(b == 0)
    def _():
        out_ref[0] = 0.0
        out_ref[1] = 0.0

    t0 = tgt_ref[...].astype(jnp.float32)                 # (H, W)
    t0b = t0.astype(jnp.bfloat16)                         # exact for 0/1 masks
    # 3x3 cross conv with zero padding == vertical 3-sum + horizontal 3-sum - center
    conv = (jnp.dot(th_ref[...], t0b, preferred_element_type=jnp.float32)
            + jnp.dot(t0b, tw_ref[...], preferred_element_type=jnp.float32)
            - t0)
    yb = conv * t0
    yb = jnp.where(yb == 5.0, 0.0, yb)                    # drop interior pixels
    out_ref[0] += jnp.sum((yb != 0.0).astype(jnp.float32))   # boundary count C
    out_ref[1] += jnp.sum((t0 != 0.0).astype(jnp.float32))   # foreground count S


def _pick_row_tile(n_rows, n_ch, lanes, in_itemsize, *, max_rows=512,
                   vmem_budget=24 * 1024 * 1024):
    """Largest row tile keeping the per-step VMEM working set under budget.

    Working set ~ 2 inputs x 2 pipeline buffers (HBM dtype) + ~5 f32
    temporaries of (C, R, lanes) + 4 f32 (R, lanes) accumulators.
    """
    lanes_p = max(128, lanes)                              # VMEM lane padding
    per_row = (2 * 2 * n_ch * lanes_p * in_itemsize        # double-buffered inputs
               + 5 * n_ch * lanes_p * 4                    # f32 temporaries
               + 4 * lanes_p * 4)                          # accumulators
    fit = max(8, vmem_budget // per_row)
    # sub-32-bit dtypes pack along sublanes: align R to the packed tile height
    align = 8 * max(1, 4 // in_itemsize)
    r = min(max_rows, fit)
    r = max(align, (r // align) * align)
    if n_rows <= r:
        return n_rows          # full-extent block is always a legal block shape
    return r


def mask_bd_and_bce_loss(net_output, target, pos_weight=1.0, bd_weight=0.5,
                         max_row_tile=512):
    """JAX/Pallas equivalent of Mask_BD_and_BCE_loss.forward.

    net_output : logits, (B, C, H, W) or (B, T, C, H, W)  (no nonlinearity)
    target     : float mask, same shape as net_output
    pos_weight : scalar pos_weight of BCEWithLogitsLoss
    """
    logits = net_output
    if target.ndim == 5:
        target = target.reshape((-1,) + tuple(target.shape[2:]))
        logits = logits.reshape((-1,) + tuple(logits.shape[2:]))
    assert logits.shape == target.shape, (logits.shape, target.shape)
    B, C, H, W = logits.shape
    HW = H * W

    # ------------- kernel 1: fused BCE + channel-0 dice statistics -------------
    if HW % 128 == 0:
        # Free reshape: lane-dense (B, C, HW//128, 128) view, NCHW stays in HBM.
        n_rows, lanes = HW // 128, 128
        x = logits.reshape(B, C, n_rows, lanes)
        t = target.reshape(B, C, n_rows, lanes)
    else:
        # Odd spatial sizes: read (B, C, H, W) in place with W on lanes.
        # No jnp.pad copies are ever materialized.
        n_rows, lanes = H, W
        x, t = logits, target

    in_itemsize = jnp.dtype(logits.dtype).itemsize
    R = _pick_row_tile(n_rows, C, lanes, in_itemsize, max_rows=max_row_tile)
    n_tiles = pl.cdiv(n_rows, R)
    needs_mask = (n_rows % R) != 0

    kernel = functools.partial(_bce_dice_kernel, n_valid_rows=n_rows,
                               row_tile=R, needs_mask=needs_mask)
    # TODO(synk): tensor-valued (per-class) pos_weight is not supported; only a
    # scalar pos_weight (the common usage), passed via SMEM scalar prefetch so
    # changing it does not trigger a recompile.
    pw = jnp.asarray([pos_weight], dtype=jnp.float32)

    partials = pl.pallas_call(
        kernel,
        out_shape=jax.ShapeDtypeStruct((B, 4, 8, 128), jnp.float32),
        grid_spec=pltpu.PrefetchScalarGridSpec(
            num_scalar_prefetch=1,
            grid=(B, n_tiles),
            in_specs=[
                pl.BlockSpec((None, C, R, lanes), lambda b, i, pw_r: (b, 0, i, 0)),
                pl.BlockSpec((None, C, R, lanes), lambda b, i, pw_r: (b, 0, i, 0)),
            ],
            out_specs=pl.BlockSpec((None, 4, 8, 128),
                                   lambda b, i, pw_r: (b, 0, 0, 0)),
            scratch_shapes=[pltpu.VMEM((R, lanes), jnp.float32)] * 4,
        ),
        compiler_params=pltpu.CompilerParams(
            # Per-batch partial sums -> the batch axis can be split across
            # TensorCores (megacore); the pixel axis accumulates sequentially.
            dimension_semantics=("parallel", "arbitrary"),
            # Above v5e's 16 MiB / v6e's 32 MiB defaults, below v7x's 64 MiB.
            vmem_limit_bytes=48 * 1024 * 1024),
    )(pw, x, t)

    sums = jnp.sum(partials[:, :, 0, 0], axis=0)            # (4,)
    bce_sum, intersect, z_sum, y_sum = sums[0], sums[1], sums[2], sums[3]

    # ------------- kernel 2: boundary / foreground counts (channel 0) ----------
    # TODO(synk): could be folded into kernel 1 (or use pltpu.roll shifts) to
    # avoid re-reading the channel-0 plane; left separate since it is only
    # ~1/(2C) of the total HBM traffic.
    th = (jnp.eye(H, dtype=jnp.bfloat16)
          + jnp.eye(H, k=1, dtype=jnp.bfloat16)
          + jnp.eye(H, k=-1, dtype=jnp.bfloat16))
    tw = (jnp.eye(W, dtype=jnp.bfloat16)
          + jnp.eye(W, k=1, dtype=jnp.bfloat16)
          + jnp.eye(W, k=-1, dtype=jnp.bfloat16))
    counts = pl.pallas_call(
        _boundary_count_kernel,
        out_shape=jax.ShapeDtypeStruct((2,), jnp.float32),
        grid_spec=pltpu.PrefetchScalarGridSpec(
            num_scalar_prefetch=0,
            grid=(B,),
            in_specs=[
                pl.BlockSpec((None, None, H, W), lambda b: (b, 0, 0, 0)),
                pl.BlockSpec((H, H), lambda b: (0, 0)),
                pl.BlockSpec((W, W), lambda b: (0, 0)),
            ],
            out_specs=pl.BlockSpec(memory_space=pltpu.MemorySpace.SMEM),
        ),
        compiler_params=pltpu.CompilerParams(
            dimension_semantics=("arbitrary",)),
    )(target, th, tw)

    c_cnt, s_cnt = counts[0], counts[1]

    loss_ce = bce_sum / jnp.float32(B * C * H * W)

    smooth = 1e-5
    alpha = 1.0 - (c_cnt + smooth) / (s_cnt + smooth)
    alpha = 2.0 * alpha - 1.0
    alpha = jnp.minimum(alpha, 0.8)
    loss_bd = (z_sum + y_sum - 2.0 * intersect + smooth) / (
        z_sum + y_sum - (1.0 + alpha) * intersect + smooth)

    return (1.0 - bd_weight) * loss_ce + bd_weight * loss_bd


def _reference_loss(logits, target, pos_weight=1.0, bd_weight=0.5):
    """Pure-JAX reference matching the PyTorch Mask_BD_and_BCE_loss semantics."""
    if target.ndim == 5:
        target = target.reshape((-1,) + tuple(target.shape[2:]))
        logits = logits.reshape((-1,) + tuple(logits.shape[2:]))
    x = logits.astype(jnp.float32)
    y = target.astype(jnp.float32)

    # BCEWithLogitsLoss(pos_weight), mean reduction.
    ce = jnp.mean(pos_weight * y * jax.nn.softplus(-x)
                  + (1.0 - y) * jax.nn.softplus(x))

    # BoundarySensitiveLoss on channel 0, sigmoid=True.
    score = jax.nn.sigmoid(x[:, 0])
    t0 = y[:, 0]
    padded = jnp.pad(t0, ((0, 0), (1, 1), (1, 1)))
    conv = (padded[:, :-2, 1:-1] + padded[:, 2:, 1:-1]
            + padded[:, 1:-1, :-2] + padded[:, 1:-1, 2:] + t0)
    yb = conv * t0
    yb = jnp.where(yb == 5.0, 0.0, yb)
    c_cnt = jnp.sum(yb != 0.0).astype(jnp.float32)
    s_cnt = jnp.sum(t0 != 0.0).astype(jnp.float32)

    smooth = 1e-5
    alpha = 1.0 - (c_cnt + smooth) / (s_cnt + smooth)
    alpha = 2.0 * alpha - 1.0
    alpha = jnp.minimum(alpha, 0.8)
    intersect = jnp.sum(score * t0)
    y_sum = jnp.sum(t0 * t0)
    z_sum = jnp.sum(score * score)
    bd = (z_sum + y_sum - 2.0 * intersect + smooth) / (
        z_sum + y_sum - (1.0 + alpha) * intersect + smooth)
    return (1.0 - bd_weight) * ce + bd_weight * bd


if __name__ == "__main__":
    key = jax.random.PRNGKey(0)
    k1, k2, k3, k4 = jax.random.split(key, 4)

    # Case 1: BraTS-style (3 region channels), H*W multiple of 128 (fast path).
    B, C, H, W = 2, 3, 16, 16
    logits = jax.random.normal(k1, (B, C, H, W), dtype=jnp.float32)
    target = (jax.random.uniform(k2, (B, C, H, W)) > 0.5).astype(jnp.float32)
    pos_weight, bd_weight = 2.0, 0.5

    loss = mask_bd_and_bce_loss(logits, target, pos_weight=pos_weight,
                                bd_weight=bd_weight)
    loss = jax.block_until_ready(loss)
    ref = _reference_loss(logits, target, pos_weight=pos_weight,
                          bd_weight=bd_weight)
    assert jnp.allclose(loss, ref, rtol=1e-4, atol=1e-5), (float(loss), float(ref))

    # Case 2: odd spatial size (H*W not a multiple of 128) + forced row tiling
    # to exercise the in-place NCHW path and the masked tail tile.
    B2, C2, H2, W2 = 2, 2, 10, 20
    logits2 = jax.random.normal(k3, (B2, C2, H2, W2), dtype=jnp.float32)
    target2 = (jax.random.uniform(k4, (B2, C2, H2, W2)) > 0.5).astype(jnp.float32)

    loss2 = mask_bd_and_bce_loss(logits2, target2, pos_weight=1.0,
                                 bd_weight=bd_weight, max_row_tile=8)
    loss2 = jax.block_until_ready(loss2)
    ref2 = _reference_loss(logits2, target2, pos_weight=1.0,
                           bd_weight=bd_weight)
    assert jnp.allclose(loss2, ref2, rtol=1e-4, atol=1e-5), (float(loss2), float(ref2))

    print("KERNEL_OK")
</pallas_src>

<mosaic_0001>
module attributes {stable_mosaic.version = 11 : i64} {
  func.func @_bce_dice_kernel(%arg0: i32, %arg1: i32, %arg2: memref<1xf32, #tpu.memory_space<smem>>, %arg3: memref<1x3x2x128xf32, #tpu.memory_space<vmem>>, %arg4: memref<1x3x2x128xf32, #tpu.memory_space<vmem>>, %arg5: memref<1x4x8x128xf32, #tpu.memory_space<vmem>>, %arg6: memref<2x128xf32, #tpu.memory_space<vmem>>, %arg7: memref<2x128xf32, #tpu.memory_space<vmem>>, %arg8: memref<2x128xf32, #tpu.memory_space<vmem>>, %arg9: memref<2x128xf32, #tpu.memory_space<vmem>>) attributes {dimension_semantics = [#tpu.dimension_semantics<parallel>, #tpu.dimension_semantics<arbitrary>], iteration_bounds = array<i64: 2, 1>, scalar_prefetch = 1 : i64, scratch_operands = 4 : i64, tpu.core_type = #tpu.core_type<tc>, window_params = [{transform_indices = @transform_0, window_bounds = array<i64: 1, 3, 2, 128>}, {transform_indices = @transform_1, window_bounds = array<i64: 1, 3, 2, 128>}, {transform_indices = @transform_2, window_bounds = array<i64: 1, 4, 8, 128>}]} {
    %c0_i32 = arith.constant 0 : i32
    %0 = arith.cmpi eq, %arg1, %c0_i32 : i32
    %1 = arith.extui %0 : i1 to i32
    %c0_i32_0 = arith.constant 0 : i32
    %2 = arith.cmpi ne, %1, %c0_i32_0 : i32
    scf.if %2 {
      %cst_34 = arith.constant 0.000000e+00 : f32
      %64 = vector.broadcast %cst_34 : f32 to vector<2x128xf32>
      %c0_35 = arith.constant 0 : index
      %c0_36 = arith.constant 0 : index
      %65 = vector.load %arg6[%c0_35, %c0_36] : memref<2x128xf32, #tpu.memory_space<vmem>>, vector<2x128xf32>
      tpu.vector_store %arg6[%c0_35, %c0_36], %64 {strides = array<i32>} : memref<2x128xf32, #tpu.memory_space<vmem>>, vector<2x128xf32>,
      %cst_37 = arith.constant 0.000000e+00 : f32
      %66 = vector.broadcast %cst_37 : f32 to vector<2x128xf32>
      %c0_38 = arith.constant 0 : index
      %c0_39 = arith.constant 0 : index
      %67 = vector.load %arg7[%c0_38, %c0_39] : memref<2x128xf32, #tpu.memory_space<vmem>>, vector<2x128xf32>
      tpu.vector_store %arg7[%c0_38, %c0_39], %66 {strides = array<i32>} : memref<2x128xf32, #tpu.memory_space<vmem>>, vector<2x128xf32>,
      %cst_40 = arith.constant 0.000000e+00 : f32
      %68 = vector.broadcast %cst_40 : f32 to vector<2x128xf32>
      %c0_41 = arith.constant 0 : index
      %c0_42 = arith.constant 0 : index
      %69 = vector.load %arg8[%c0_41, %c0_42] : memref<2x128xf32, #tpu.memory_space<vmem>>, vector<2x128xf32>
      tpu.vector_store %arg8[%c0_41, %c0_42], %68 {strides = array<i32>} : memref<2x128xf32, #tpu.memory_space<vmem>>, vector<2x128xf32>,
      %cst_43 = arith.constant 0.000000e+00 : f32
      %70 = vector.broadcast %cst_43 : f32 to vector<2x128xf32>
      %c0_44 = arith.constant 0 : index
      %c0_45 = arith.constant 0 : index
      %71 = vector.load %arg9[%c0_44, %c0_45] : memref<2x128xf32, #tpu.memory_space<vmem>>, vector<2x128xf32>
      tpu.vector_store %arg9[%c0_44, %c0_45], %70 {strides = array<i32>} : memref<2x128xf32, #tpu.memory_space<vmem>>, vector<2x128xf32>,
    } else {
    }
    %c0 = arith.constant 0 : index
    %3 = memref.load %arg2[%c0] : memref<1xf32, #tpu.memory_space<smem>>
    %c0_1 = arith.constant 0 : index
    %c0_2 = arith.constant 0 : index
    %c0_3 = arith.constant 0 : index
    %c0_4 = arith.constant 0 : index
    %4 = vector.load %arg3[%c0_1, %c0_2, %c0_3, %c0_4] : memref<1x3x2x128xf32, #tpu.memory_space<vmem>>, vector<1x3x2x128xf32>
    %5 = vector.shape_cast %4 : vector<1x3x2x128xf32> to vector<3x2x128xf32>
    %c0_5 = arith.constant 0 : index
    %c0_6 = arith.constant 0 : index
    %c0_7 = arith.constant 0 : index
    %c0_8 = arith.constant 0 : index
    %6 = vector.load %arg4[%c0_5, %c0_6, %c0_7, %c0_8] : memref<1x3x2x128xf32, #tpu.memory_space<vmem>>, vector<1x3x2x128xf32>
    %7 = vector.shape_cast %6 : vector<1x3x2x128xf32> to vector<3x2x128xf32>
    %8 = math.absf %5 : vector<3x2x128xf32>
    %cst = arith.constant 0.000000e+00 : f32
    %9 = vector.broadcast %cst : f32 to vector<3x2x128xf32>
    %10 = arith.subf %9, %8 : vector<3x2x128xf32>
    %11 = math.exp %10 : vector<3x2x128xf32>
    %cst_9 = arith.constant 0.000000e+00 : f32
    %12 = vector.broadcast %cst_9 : f32 to vector<3x2x128xf32>
    %13 = arith.maximumf %5, %12 : vector<3x2x128xf32>
    %cst_10 = arith.constant 1.000000e+00 : f32
    %14 = vector.broadcast %cst_10 : f32 to vector<3x2x128xf32>
    %15 = arith.addf %14, %11 : vector<3x2x128xf32>
    %16 = math.log %15 : vector<3x2x128xf32>
    %17 = arith.addf %13, %16 : vector<3x2x128xf32>
    %18 = vector.broadcast %3 : f32 to vector<3x2x128xf32>
    %19 = arith.mulf %18, %7 : vector<3x2x128xf32>
    %cst_11 = arith.constant 1.000000e+00 : f32
    %20 = vector.broadcast %cst_11 : f32 to vector<3x2x128xf32>
    %21 = arith.subf %20, %7 : vector<3x2x128xf32>
    %22 = arith.addf %19, %21 : vector<3x2x128xf32>
    %23 = arith.mulf %17, %22 : vector<3x2x128xf32>
    %24 = arith.mulf %7, %5 : vector<3x2x128xf32>
    %25 = vector.broadcast %3 : f32 to vector<3x2x128xf32>
    %26 = arith.mulf %25, %24 : vector<3x2x128xf32>
    %27 = arith.subf %23, %26 : vector<3x2x128xf32>
    %28 = vector.extract_strided_slice %5 {offsets = [0, 0, 0], sizes = [1, 2, 128], strides = [1, 1, 1]} : vector<3x2x128xf32> to vector<1x2x128xf32>
    %29 = vector.shape_cast %28 : vector<1x2x128xf32> to vector<2x128xf32>
    %30 = vector.extract_strided_slice %7 {offsets = [0, 0, 0], sizes = [1, 2, 128], strides = [1, 1, 1]} : vector<3x2x128xf32> to vector<1x2x128xf32>
    %31 = vector.shape_cast %30 : vector<1x2x128xf32> to vector<2x128xf32>
    %32 = vector.extract_strided_slice %11 {offsets = [0, 0, 0], sizes = [1, 2, 128], strides = [1, 1, 1]} : vector<3x2x128xf32> to vector<1x2x128xf32>
    %33 = vector.shape_cast %32 : vector<1x2x128xf32> to vector<2x128xf32>
    %cst_12 = arith.constant 1.000000e+00 : f32
    %34 = vector.broadcast %cst_12 : f32 to vector<2x128xf32>
    %35 = arith.addf %34, %33 : vector<2x128xf32>
    %36 = tpu.reciprocal %35 {approx = true} : vector<2x128xf32> -> vector<2x128xf32>
    %37 = arith.mulf %35, %36 : vector<2x128xf32>
    %cst_13 = arith.constant 2.000000e+00 : f32
    %38 = vector.broadcast %cst_13 : f32 to vector<2x128xf32>
    %39 = arith.subf %38, %37 : vector<2x128xf32>
    %40 = arith.mulf %36, %39 : vector<2x128xf32>
    %cst_14 = arith.constant 0.000000e+00 : f32
    %41 = vector.broadcast %cst_14 : f32 to vector<2x128xf32>
    %42 = arith.cmpf oge, %29, %41 : vector<2x128xf32>
    %43 = arith.mulf %33, %40 : vector<2x128xf32>
    %44 = arith.select %42, %40, %43 : vector<2x128xi1>, vector<2x128xf32>
    %45 = arith.mulf %44, %31 : vector<2x128xf32>
    %46 = arith.mulf %44, %44 : vector<2x128xf32>
    %47 = arith.mulf %31, %31 : vector<2x128xf32>
    %c0_15 = arith.constant 0 : index
    %c0_16 = arith.constant 0 : index
    %48 = vector.load %arg6[%c0_15, %c0_16] : memref<2x128xf32, #tpu.memory_space<vmem>>, vector<2x128xf32>
    %cst_17 = arith.constant dense<0.000000e+00> : vector<2x128xf32>
    %49 = vector.multi_reduction <add>, %27, %cst_17 [0] : vector<3x2x128xf32> to vector<2x128xf32>
    %50 = arith.addf %48, %49 : vector<2x128xf32>
    %c0_18 = arith.constant 0 : index
    %c0_19 = arith.constant 0 : index
    %51 = vector.load %arg6[%c0_18, %c0_19] : memref<2x128xf32, #tpu.memory_space<vmem>>, vector<2x128xf32>
    tpu.vector_store %arg6[%c0_18, %c0_19], %50 {strides = array<i32>} : memref<2x128xf32, #tpu.memory_space<vmem>>, vector<2x128xf32>,
    %c0_20 = arith.constant 0 : index
    %c0_21 = arith.constant 0 : index
    %52 = vector.load %arg7[%c0_20, %c0_21] : memref<2x128xf32, #tpu.memory_space<vmem>>, vector<2x128xf32>
    %53 = arith.addf %52, %45 : vector<2x128xf32>
    %c0_22 = arith.constant 0 : index
    %c0_23 = arith.constant 0 : index
    %54 = vector.load %arg7[%c0_22, %c0_23] : memref<2x128xf32, #tpu.memory_space<vmem>>, vector<2x128xf32>
    tpu.vector_store %arg7[%c0_22, %c0_23], %53 {strides = array<i32>} : memref<2x128xf32, #tpu.memory_space<vmem>>, vector<2x128xf32>,
    %c0_24 = arith.constant 0 : index
    %c0_25 = arith.constant 0 : index
    %55 = vector.load %arg8[%c0_24, %c0_25] : memref<2x128xf32, #tpu.memory_space<vmem>>, vector<2x128xf32>
    %56 = arith.addf %55, %46 : vector<2x128xf32>
    %c0_26 = arith.constant 0 : index
    %c0_27 = arith.constant 0 : index
    %57 = vector.load %arg8[%c0_26, %c0_27] : memref<2x128xf32, #tpu.memory_space<vmem>>, vector<2x128xf32>
    tpu.vector_store %arg8[%c0_26, %c0_27], %56 {strides = array<i32>} : memref<2x128xf32, #tpu.memory_space<vmem>>, vector<2x128xf32>,
    %c0_28 = arith.constant 0 : index
    %c0_29 = arith.constant 0 : index
    %58 = vector.load %arg9[%c0_28, %c0_29] : memref<2x128xf32, #tpu.memory_space<vmem>>, vector<2x128xf32>
    %59 = arith.addf %58, %47 : vector<2x128xf32>
    %c0_30 = arith.constant 0 : index
    %c0_31 = arith.constant 0 : index
    %60 = vector.load %arg9[%c0_30, %c0_31] : memref<2x128xf32, #tpu.memory_space<vmem>>, vector<2x128xf32>
    tpu.vector_store %arg9[%c0_30, %c0_31], %59 {strides = array<i32>} : memref<2x128xf32, #tpu.memory_space<vmem>>, vector<2x128xf32>,
    %c0_i32_32 = arith.constant 0 : i32
    %61 = arith.cmpi eq, %arg1, %c0_i32_32 : i32
    %62 = arith.extui %61 : i1 to i32
    %c0_i32_33 = arith.constant 0 : i32
    %63 = arith.cmpi ne, %62, %c0_i32_33 : i32
    scf.if %63 {
      %c0_34 = arith.constant 0 : index
      %c0_35 = arith.constant 0 : index
      %64 = vector.load %arg6[%c0_34, %c0_35] : memref<2x128xf32, #tpu.memory_space<vmem>>, vector<2x128xf32>
      %65 = vector.shape_cast %64 : vector<2x128xf32> to vector<1x2x128xf32>
      %cst_36 = arith.constant dense<0.000000e+00> : vector<1xf32>
      %66 = vector.multi_reduction <add>, %65, %cst_36 [1, 2] : vector<1x2x128xf32> to vector<1xf32>
      %67 = vector.shape_cast %66 : vector<1xf32> to vector<1x1x1xf32>
      %68 = vector.extract %67[0, 0, 0] : f32 from vector<1x1x1xf32>
      %69 = vector.broadcast %68 : f32 to vector<8x128xf32>
      %c0_37 = arith.constant 0 : index
      %c0_38 = arith.constant 0 : index
      %c0_39 = arith.constant 0 : index
      %c0_40 = arith.constant 0 : index
      %70 = vector.load %arg5[%c0_37, %c0_38, %c0_39, %c0_40] : memref<1x4x8x128xf32, #tpu.memory_space<vmem>>, vector<1x1x8x128xf32>
      %71 = vector.shape_cast %70 : vector<1x1x8x128xf32> to vector<8x128xf32>
      %72 = vector.shape_cast %69 : vector<8x128xf32> to vector<1x1x8x128xf32>
      tpu.vector_store %arg5[%c0_37, %c0_38, %c0_39, %c0_40], %72 {strides = array<i32>} : memref<1x4x8x128xf32, #tpu.memory_space<vmem>>, vector<1x1x8x128xf32>,
      %c0_41 = arith.constant 0 : index
      %c0_42 = arith.constant 0 : index
      %73 = vector.load %arg7[%c0_41, %c0_42] : memref<2x128xf32, #tpu.memory_space<vmem>>, vector<2x128xf32>
      %74 = vector.shape_cast %73 : vector<2x128xf32> to vector<1x2x128xf32>
      %cst_43 = arith.constant dense<0.000000e+00> : vector<1xf32>
      %75 = vector.multi_reduction <add>, %74, %cst_43 [1, 2] : vector<1x2x128xf32> to vector<1xf32>
      %76 = vector.shape_cast %75 : vector<1xf32> to vector<1x1x1xf32>
      %77 = vector.extract %76[0, 0, 0] : f32 from vector<1x1x1xf32>
      %78 = vector.broadcast %77 : f32 to vector<8x128xf32>
      %c0_44 = arith.constant 0 : index
      %c1 = arith.constant 1 : index
      %c0_45 = arith.constant 0 : index
      %c0_46 = arith.constant 0 : index
      %79 = vector.load %arg5[%c0_44, %c1, %c0_45, %c0_46] : memref<1x4x8x128xf32, #tpu.memory_space<vmem>>, vector<1x1x8x128xf32>
      %80 = vector.shape_cast %79 : vector<1x1x8x128xf32> to vector<8x128xf32>
      %81 = vector.shape_cast %78 : vector<8x128xf32> to vector<1x1x8x128xf32>
      tpu.vector_store %arg5[%c0_44, %c1, %c0_45, %c0_46], %81 {strides = array<i32>} : memref<1x4x8x128xf32, #tpu.memory_space<vmem>>, vector<1x1x8x128xf32>,
      %c0_47 = arith.constant 0 : index
      %c0_48 = arith.constant 0 : index
      %82 = vector.load %arg8[%c0_47, %c0_48] : memref<2x128xf32, #tpu.memory_space<vmem>>, vector<2x128xf32>
      %83 = vector.shape_cast %82 : vector<2x128xf32> to vector<1x2x128xf32>
      %cst_49 = arith.constant dense<0.000000e+00> : vector<1xf32>
      %84 = vector.multi_reduction <add>, %83, %cst_49 [1, 2] : vector<1x2x128xf32> to vector<1xf32>
      %85 = vector.shape_cast %84 : vector<1xf32> to vector<1x1x1xf32>
      %86 = vector.extract %85[0, 0, 0] : f32 from vector<1x1x1xf32>
      %87 = vector.broadcast %86 : f32 to vector<8x128xf32>
      %c0_50 = arith.constant 0 : index
      %c2 = arith.constant 2 : index
      %c0_51 = arith.constant 0 : index
      %c0_52 = arith.constant 0 : index
      %88 = vector.load %arg5[%c0_50, %c2, %c0_51, %c0_52] : memref<1x4x8x128xf32, #tpu.memory_space<vmem>>, vector<1x1x8x128xf32>
      %89 = vector.shape_cast %88 : vector<1x1x8x128xf32> to vector<8x128xf32>
      %90 = vector.shape_cast %87 : vector<8x128xf32> to vector<1x1x8x128xf32>
      tpu.vector_store %arg5[%c0_50, %c2, %c0_51, %c0_52], %90 {strides = array<i32>} : memref<1x4x8x128xf32, #tpu.memory_space<vmem>>, vector<1x1x8x128xf32>,
      %c0_53 = arith.constant 0 : index
      %c0_54 = arith.constant 0 : index
      %91 = vector.load %arg9[%c0_53, %c0_54] : memref<2x128xf32, #tpu.memory_space<vmem>>, vector<2x128xf32>
      %92 = vector.shape_cast %91 : vector<2x128xf32> to vector<1x2x128xf32>
      %cst_55 = arith.constant dense<0.000000e+00> : vector<1xf32>
      %93 = vector.multi_reduction <add>, %92, %cst_55 [1, 2] : vector<1x2x128xf32> to vector<1xf32>
      %94 = vector.shape_cast %93 : vector<1xf32> to vector<1x1x1xf32>
      %95 = vector.extract %94[0, 0, 0] : f32 from vector<1x1x1xf32>
      %96 = vector.broadcast %95 : f32 to vector<8x128xf32>
      %c0_56 = arith.constant 0 : index
      %c3 = arith.constant 3 : index
      %c0_57 = arith.constant 0 : index
      %c0_58 = arith.constant 0 : index
      %97 = vector.load %arg5[%c0_56, %c3, %c0_57, %c0_58] : memref<1x4x8x128xf32, #tpu.memory_space<vmem>>, vector<1x1x8x128xf32>
      %98 = vector.shape_cast %97 : vector<1x1x8x128xf32> to vector<8x128xf32>
      %99 = vector.shape_cast %96 : vector<8x128xf32> to vector<1x1x8x128xf32>
      tpu.vector_store %arg5[%c0_56, %c3, %c0_57, %c0_58], %99 {strides = array<i32>} : memref<1x4x8x128xf32, #tpu.memory_space<vmem>>, vector<1x1x8x128xf32>,
    } else {
    }
    return
  }
  func.func @transform_0(%arg0: i32, %arg1: i32, %arg2: memref<1xf32, #tpu.memory_space<smem>>) -> (i32, i32, i32, i32) {
    %c0_i32 = arith.constant 0 : i32
    %c0_i32_0 = arith.constant 0 : i32
    %c0_i32_1 = arith.constant 0 : i32
    return %arg0, %c0_i32, %arg1, %c0_i32_0 : i32, i32, i32, i32
  }
  func.func @transform_1(%arg0: i32, %arg1: i32, %arg2: memref<1xf32, #tpu.memory_space<smem>>) -> (i32, i32, i32, i32) {
    %c0_i32 = arith.constant 0 : i32
    %c0_i32_0 = arith.constant 0 : i32
    %c0_i32_1 = arith.constant 0 : i32
    return %arg0, %c0_i32, %arg1, %c0_i32_0 : i32, i32, i32, i32
  }
  func.func @transform_2(%arg0: i32, %arg1: i32, %arg2: memref<1xf32, #tpu.memory_space<smem>>) -> (i32, i32, i32, i32) {
    %c0_i32 = arith.constant 0 : i32
    %c0_i32_0 = arith.constant 0 : i32
    %c0_i32_1 = arith.constant 0 : i32
    %c0_i32_2 = arith.constant 0 : i32
    return %arg0, %c0_i32, %c0_i32_0, %c0_i32_1 : i32, i32, i32, i32
  }
}

</mosaic_0001>

<llo_original>
// kernel: tpu_custom_call.1
$region0: #{tpu_custom_call.1}
  #allocation0 [shape = 'u32[]', space=smem, size = 0x4, offset = 0x4, fixed_abs, tag = 'smem constant byte address 0x4 - core index']
  #allocation1 [shape = 'u32[144,128]{1,0:T(1,128)}', space=vmem, size = 0x12000, scoped, tag = 'internal scratch']
  #allocation2 [shape = 'f32[2,128]{1,0:T(2,128)}', space=vmem, size = 0x400, scoped, tag = 'scratch operand']
  #allocation3 [shape = 'f32[2,128]{1,0:T(2,128)}', space=vmem, size = 0x400, scoped, tag = 'scratch operand']
  #allocation4 [shape = 'f32[2,128]{1,0:T(2,128)}', space=vmem, size = 0x400, scoped, tag = 'scratch operand']
  #allocation5 [shape = 'f32[2,128]{1,0:T(2,128)}', space=vmem, size = 0x400, scoped, tag = 'scratch operand']
  #allocation6 [shape = 's32[1]{0}', space=sflag, size = 0x4, scoped, tag = 'scoped memory for tpu_custom_call.1']
  #allocation7 [shape = 'f32[1]{0:T(128)S(6)}', space=smem, size = 0x200, scoped, tag = 'prefetched SMEM operand 0']
  %s0 = inlined_call_operand.<no memory space> [shape: f32[1], index: 0, kind: input, shape index: {}]
  %s1 = inlined_call_operand.hbm [shape: f32[2,3,2,128], index: 1, kind: input, shape index: {}]
  %s2 = inlined_call_operand.hbm [shape: f32[2,3,2,128], index: 2, kind: input, shape index: {}]
  %s3 = inlined_call_operand.hbm [shape: f32[2,4,8,128], index: 3, kind: output, shape index: {}]
  %s4 = sld [smem:[#allocation0]]
  $region57: #{tpu_custom_call.1} parent=0
    _
  %s6 = ssub.s32 1, %s4
  %s7 = scalar_select 0, %s6, %s4
  %8 = sst [smem:[#allocation7]] %s0
  $region1: #{tpu_custom_call.1} parent=0
    #allocation8 [shape = 'u8[6144]{0}', space=vmem, size = 0x1800, scoped, tag = 'input window, operand 1']
    #allocation9 [shape = 's32[2]{0}', space=sflag, size = 0x8, scoped, tag = 'scoped memory for tpu_custom_call.1']
    #allocation10 [shape = 's32[2]{0}', space=sflag, size = 0x8, scoped, tag = 'scoped memory for tpu_custom_call.1']
    #allocation11 [shape = 'u8[6144]{0}', space=vmem, size = 0x1800, scoped, tag = 'input window, operand 2']
    #allocation12 [shape = 's32[2]{0}', space=sflag, size = 0x8, scoped, tag = 'scoped memory for tpu_custom_call.1']
    #allocation13 [shape = 'u8[32768]{0}', space=vmem, size = 0x8000, scoped, tag = 'output window, operand 0']
    %9 = vsyncpa [#allocation9], 0
    %s10 = scalar_lea.sflag [#allocation9], 1
    %11 = vsyncpa %s10, 0
    %12 = vsyncpa [#allocation12], 0
    %s13 = scalar_lea.sflag [#allocation12], 1
    %14 = vsyncpa %s13, 0
    %15 = vsyncpa [#allocation10], 0
    %s16 = scalar_lea.sflag [#allocation10], 1
    %17 = vsyncpa %s16, 0
    loop: start=0, step=1, limit=4
    $region2: #{tpu_custom_call.1} parent=1 // loop_pre_header
      _
    $region3: #{tpu_custom_call.1} parent=1 // loop_header
      %s19 = sphi 0, %s23
      %p20 = scmp.ge.s32.totalorder %s19, 4
      %s26 = sphi 0, %s38
      %s27 = sphi 0, %s34
      %s28 = sphi 0, %s26
      %s29 = sphi 0, %s27
      %s30 = sphi 0, %s28
      %s31 = sphi 0, %s29
      %s43 = sphi 0, %s45
      %s46 = sphi 0, %s43
      %s47 = sphi 0, %s46
      %s63 = sphi 0, %s47
      %s71 = sphi 0, %s73
      %s74 = sphi 0, %s71
      %s75 = sphi 0, %s74
      %s91 = sphi 0, %s75
      %s97 = sphi 0, %s99
      %s100 = sphi 0, %s97
      %s101 = sphi 0, %s100
      %s117 = sphi 0, %s101
    $region4: #{tpu_custom_call.1} parent=1 // loop_header_branch
      %22 = sbr.rel (%p20) target = $region8
    $region5: #{tpu_custom_call.1} parent=1 // loop_body
      %s24 = ssub.s32 %s19, 1
      %s25 = ssub.s32 %s19, 2
      %s32 = sadd.s32 1, %s27
      %p33 = scmp.ge.s32.totalorder %s32, 1
      %s34 = scalar_select %p33, 0, %s32
      %s35 = sadd.s32 1, %s26
      %s36 = scalar_select %p33, %s35, %s26
      %p37 = scmp.ge.s32.totalorder %s36, 2
      %s38 = scalar_select %p37, 0, %s36
      %s39 = ssub.s32 %s26, %s38
      %s40 = ssub.s32 %s27, %s34
      %s41 = sor.u32 %s39, %s40
      %p42 = scmp.eq.s32.totalorder %s41, 0
      %s44 = sadd.s32 %s43, 1
      %s45 = scalar_select %p42, %s43, %s44
      %p48 = pneg %p42
      %p49 = scmp.eq.s32.totalorder %s19, 1
      %p50 = por %p48, %p49
      %p51 = scmp.ne.s32.totalorder %s43, %s46
      %p52 = scmp.eq.s32.totalorder %s19, 0
      %p53 = por %p51, %p52
      %p54 = scmp.ne.s32.totalorder %s43, %s46
      %p55 = scmp.eq.s32.totalorder %s24, 1
      %p56 = por %p54, %p55
      %p57 = scmp.ne.s32.totalorder %s46, %s47
      %p58 = scmp.eq.s32.totalorder %s24, 0
      %p59 = por %p57, %p58
      %p60 = scmp.ne.s32.totalorder %s46, %s47
      %p61 = scmp.eq.s32.totalorder %s25, 1
      %p62 = por %p60, %p61
      %p64 = scmp.ne.s32.totalorder %s47, %s63
      %p65 = scmp.eq.s32.totalorder %s25, 0
      %p66 = por %p64, %p65
      %s67 = ssub.s32 %s26, %s38
      %s68 = ssub.s32 %s27, %s34
      %s69 = sor.u32 %s67, %s68
      %p70 = scmp.eq.s32.totalorder %s69, 0
      %s72 = sadd.s32 %s71, 1
      %s73 = scalar_select %p70, %s71, %s72
      %p76 = pneg %p70
      %p77 = scmp.eq.s32.totalorder %s19, 1
      %p78 = por %p76, %p77
      %p79 = scmp.ne.s32.totalorder %s71, %s74
      %p80 = scmp.eq.s32.totalorder %s19, 0
      %p81 = por %p79, %p80
      %p82 = scmp.ne.s32.totalorder %s71, %s74
      %p83 = scmp.eq.s32.totalorder %s24, 1
      %p84 = por %p82, %p83
      %p85 = scmp.ne.s32.totalorder %s74, %s75
      %p86 = scmp.eq.s32.totalorder %s24, 0
      %p87 = por %p85, %p86
      %p88 = scmp.ne.s32.totalorder %s74, %s75
      %p89 = scmp.eq.s32.totalorder %s25, 1
      %p90 = por %p88, %p89
      %p92 = scmp.ne.s32.totalorder %s75, %s91
      %p93 = scmp.eq.s32.totalorder %s25, 0
      %p94 = por %p92, %p93
      %s95 = ssub.s32 %s26, %s38
      %p96 = scmp.eq.s32.totalorder %s95, 0
      %s98 = sadd.s32 %s97, 1
      %s99 = scalar_select %p96, %s97, %s98
      %p102 = pneg %p96
      %p103 = scmp.eq.s32.totalorder %s19, 1
      %p104 = por %p102, %p103
      %p105 = scmp.ne.s32.totalorder %s97, %s100
      %p106 = scmp.eq.s32.totalorder %s19, 0
      %p107 = por %p105, %p106
      %p108 = scmp.ne.s32.totalorder %s97, %s100
      %p109 = scmp.eq.s32.totalorder %s24, 1
      %p110 = por %p108, %p109
      %p111 = scmp.ne.s32.totalorder %s100, %s101
      %p112 = scmp.eq.s32.totalorder %s24, 0
      %p113 = por %p111, %p112
      %p114 = scmp.ne.s32.totalorder %s100, %s101
      %p115 = scmp.eq.s32.totalorder %s25, 1
      %p116 = por %p114, %p115
      %p118 = scmp.ne.s32.totalorder %s101, %s117
      %p119 = scmp.eq.s32.totalorder %s25, 0
      %p120 = por %p118, %p119
      %p121 = scmp.le.s32.totalorder 1, %s19
      %p122 = scmp.lt.s32.totalorder %s19, 3
      %p123 = pnand %p121, %p122
      %p124 = pneg %p123
      // Predicated region
      $region9: #{tpu_custom_call.1} parent=5 // pred_check
        _
      $region10: #{tpu_custom_call.1} parent=5 // pred_check_branch
        %126 = sbr.rel (%p123) target = $region12
      $region11: #{tpu_custom_call.1} parent=5 // pred_region
        %s127 = ssub.s32 %s19, 1
      $region12: #{tpu_custom_call.1} parent=5 // pred_fallthru
        _
      %p128 = scmp.lt.s32.totalorder %s19, 2
      // Predicated region
      $region13: #{tpu_custom_call.1} parent=5 // pred_check
        %p129 = pneg %p128
      $region14: #{tpu_custom_call.1} parent=5 // pred_check_branch
        %131 = sbr.rel (%p129) target = $region16
      $region15: #{tpu_custom_call.1} parent=5 // pred_region
        // Predicated region
        $region17: #{tpu_custom_call.1} parent=15 // pred_check
          %p132 = pneg %p53
        $region18: #{tpu_custom_call.1} parent=15 // pred_check_branch
          %134 = sbr.rel (%p132) target = $region20
        $region19: #{tpu_custom_call.1} parent=15 // pred_region
          %s135 = sand.u32 %s43, 1
          %s136 = scalar_lea.sflag [#allocation9], %s135
          %s137 = sand.u32 %s43, 1
          %s138 = smul.addr %s137, 6
          %s139 = scalar_lea.vmem [#allocation8], %s138
          %s141 = ssub.s32 96, 96
          %142 = vsyncadd %s136, %s141
          %s143 = smul.addr %s26, 3
          %s144 = sadd.s32 %s27, %s143
          %s145 = smul.addr %s144, 32
          %s146 = scalar_lea.hbm %s1, %s145
          %s147 = sshll.u32 %s139, 4
          %s148 = int_to_ptr.vmem [resolvable:$true] %s147
          %153 = dma.hbm_to_vmem [thread:$0]  %s146, 96, %s148, %s136, 32, 32, 2
        $region20: #{tpu_custom_call.1} parent=15 // pred_fallthru
          _
        // Predicated region
        $region21: #{tpu_custom_call.1} parent=15 // pred_check
          %p154 = pneg %p81
        $region22: #{tpu_custom_call.1} parent=15 // pred_check_branch
          %156 = sbr.rel (%p154) target = $region24
        $region23: #{tpu_custom_call.1} parent=15 // pred_region
          %s157 = sand.u32 %s71, 1
          %s158 = scalar_lea.sflag [#allocation12], %s157
          %s159 = sand.u32 %s71, 1
          %s160 = smul.addr %s159, 6
          %s161 = scalar_lea.vmem [#allocation11], %s160
          %s163 = ssub.s32 96, 96
          %164 = vsyncadd %s158, %s163
          %s165 = smul.addr %s26, 3
          %s166 = sadd.s32 %s27, %s165
          %s167 = smul.addr %s166, 32
          %s168 = scalar_lea.hbm %s2, %s167
          %s169 = sshll.u32 %s161, 4
          %s170 = int_to_ptr.vmem [resolvable:$true] %s169
          %175 = dma.hbm_to_vmem [thread:$0]  %s168, 96, %s170, %s158, 32, 32, 2
        $region24: #{tpu_custom_call.1} parent=15 // pred_fallthru
          _
      $region16: #{tpu_custom_call.1} parent=5 // pred_fallthru
        _
      %p176 = scmp.le.s32.totalorder 1, %s19
      %p177 = scmp.lt.s32.totalorder %s19, 3
      %p178 = pnand %p176, %p177
      %p179 = pneg %p178
      // Predicated region
      $region25: #{tpu_custom_call.1} parent=5 // pred_check
        _
      $region26: #{tpu_custom_call.1} parent=5 // pred_check_branch
        %181 = sbr.rel (%p178) target = $region28
      $region27: #{tpu_custom_call.1} parent=5 // pred_region
        %s182 = ssub.s32 %s19, 1
        %s183 = sand.u32 %s46, 1
        %s184 = scalar_lea.sflag [#allocation9], %s183
        %s185 = sand.u32 %s46, 1
        %s186 = smul.addr %s185, 6
        %s187 = scalar_lea.vmem [#allocation8], %s186
        // Predicated region
        $region29: #{tpu_custom_call.1} parent=27 // pred_check
          %p188 = pneg %p59
        $region30: #{tpu_custom_call.1} parent=27 // pred_check_branch
          %190 = sbr.rel (%p188) target = $region32
        $region31: #{tpu_custom_call.1} parent=27 // pred_region
          %191 = dma.done %s184, 96
        $region32: #{tpu_custom_call.1} parent=27 // pred_fallthru
          _
        %s192 = sand.u32 %s74, 1
        %s193 = scalar_lea.sflag [#allocation12], %s192
        %s194 = sand.u32 %s74, 1
        %s195 = smul.addr %s194, 6
        %s196 = scalar_lea.vmem [#allocation11], %s195
        // Predicated region
        $region33: #{tpu_custom_call.1} parent=27 // pred_check
          %p197 = pneg %p87
        $region34: #{tpu_custom_call.1} parent=27 // pred_check_branch
          %199 = sbr.rel (%p197) target = $region36
        $region35: #{tpu_custom_call.1} parent=27 // pred_region
          %200 = dma.done %s193, 96
        $region36: #{tpu_custom_call.1} parent=27 // pred_fallthru
          _
        %s201 = sand.u32 %s46, 1
        %s202 = scalar_lea.sflag [#allocation9], %s201
        %s203 = sand.u32 %s46, 1
        %s204 = smul.addr %s203, 6
        %s205 = scalar_lea.vmem [#allocation8], %s204
        %p206 = pneg %p59
        %p207 = pneg %p56
        %s208 = sand.u32 %s74, 1
        %s209 = scalar_lea.sflag [#allocation12], %s208
        %s210 = sand.u32 %s74, 1
        %s211 = smul.addr %s210, 6
        %s212 = scalar_lea.vmem [#allocation11], %s211
        %p213 = pneg %p87
        %p214 = pneg %p84
        %p215 = pneg %p113
        %p216 = pneg %p110
        %s217 = sand.u32 %s100, 1
        %s218 = scalar_lea.sflag [#allocation10], %s217
        %s219 = sand.u32 %s100, 1
        %s220 = smul.addr %s219, 32
        %s221 = scalar_lea.vmem [#allocation13], %s220
        %p222 = scmp.eq.s32.totalorder %s29, 0
        // Predicated region
        $region37: #{tpu_custom_call.1} parent=27 // pred_check
          %p223 = pneg %p222
        $region38: #{tpu_custom_call.1} parent=27 // pred_check_branch
          %225 = sbr.rel (%p223) target = $region40
        $region39: #{tpu_custom_call.1} parent=27 // pred_region
          %226 = vst [vmem:[#allocation2] sm:$0x3] 0.0
          %227 = vst [vmem:[#allocation3] sm:$0x3] 0.0
          %228 = vst [vmem:[#allocation4] sm:$0x3] 0.0
          %229 = vst [vmem:[#allocation5] sm:$0x3] 0.0
        $region40: #{tpu_custom_call.1} parent=27 // pred_fallthru
          _
        %s230 = sld [smem:[#allocation7]]
        %v231 = vld [vmem:[%s187] sm:$0x3]
        %v232 = vld [vmem:[%s187 + $0x2] sm:$0x3]
        %v233 = vld [vmem:[%s187 + $0x4] sm:$0x3]
        %v234 = vld [vmem:[%s196] sm:$0x3]
        %v235 = vld [vmem:[%s196 + $0x2] sm:$0x3]
        %v236 = vld [vmem:[%s196 + $0x4] sm:$0x3]
        %v237 = vand.u32 2147483647, %v231
        %v238 = vand.u32 2147483647, %v232
        %v239 = vand.u32 2147483647, %v233
        %v240 = vsub.f32 0.0, %v237
        %v241 = vsub.f32 0.0, %v238
        %v242 = vsub.f32 0.0, %v239
        %v243 = vmul.f32 %v240, 1.442695
        %v244 = vpow.pop %v243
        %v245 = vmul.f32 %v241, 1.442695
        %v246 = vpow.pop %v245
        %v247 = vmul.f32 %v242, 1.442695
        %v248 = vpow.pop %v247
        %v249 = vmax.f32 %v231, 0.0
        %v250 = vmax.f32 %v232, 0.0
        %v251 = vmax.f32 %v233, 0.0
        %v252 = vadd.f32 %v244, 1.0
        %v253 = vadd.f32 %v246, 1.0
        %v254 = vadd.f32 %v248, 1.0
        %v255 = vlog2.pop %v252
        %v256 = vmul.f32 %v255, 0.6931472
        %v257 = vlog2.pop %v253
        %v258 = vmul.f32 %v257, 0.6931472
        %v259 = vlog2.pop %v254
        %v260 = vmul.f32 %v259, 0.6931472
        %v261 = vadd.f32 %v249, %v256
        %v262 = vadd.f32 %v250, %v258
        %v263 = vadd.f32 %v251, %v260
        %v264 = vstv %s230
        %v265 = vmul.f32 %v264, %v234
        %v266 = vmul.f32 %v264, %v235
        %v267 = vmul.f32 %v264, %v236
        %v268 = vsub.f32 1.0, %v234
        %v269 = vsub.f32 1.0, %v235
        %v270 = vsub.f32 1.0, %v236
        %v271 = vadd.f32 %v265, %v268
        %v272 = vadd.f32 %v266, %v269
        %v273 = vadd.f32 %v267, %v270
        %v274 = vmul.f32 %v261, %v271
        %v275 = vmul.f32 %v262, %v272
        %v276 = vmul.f32 %v263, %v273
        %v277 = vmul.f32 %v234, %v231
        %v278 = vmul.f32 %v235, %v232
        %v279 = vmul.f32 %v236, %v233
        %v280 = vmul.f32 %v264, %v277
        %v281 = vmul.f32 %v264, %v278
        %v282 = vmul.f32 %v264, %v279
        %v283 = vsub.f32 %v274, %v280
        %v284 = vsub.f32 %v275, %v281
        %v285 = vsub.f32 %v276, %v282
        %v286 = vrcp.pop %v252
        %v287 = vmul.f32 %v252, %v286
        %v288 = vsub.f32 2.0, %v287
        %v289 = vmul.f32 %v286, %v288
        %vm290 = vcmp.ge.f32.partialorder %v231, 0.0
        %v291 = vmul.f32 %v244, %v289
        %v292 = vsel %vm290, %v289, %v291
        %v293 = vmul.f32 %v292, %v234
        %v294 = vmul.f32 %v292, %v292
        %v295 = vmul.f32 %v234, %v234
        %v296 = vld [vmem:[#allocation2] sm:$0x3]
        %vm297 = vcmask 1041408
        %v298 = vsel %vm297, %v283, 0.0
        %v299 = vsel %vm297, %v284, 0.0
        %v300 = vadd.f32 %v298, %v299
        %v301 = vsel %vm297, %v285, 0.0
        %v302 = vadd.f32 %v300, %v301
        %v303 = vadd.f32 %v296, %v302
        %304 = vst [vmem:[#allocation2] sm:$0x3] %v303
        %v305 = vld [vmem:[#allocation3] sm:$0x3]
        %v306 = vadd.f32 %v305, %v293
        %307 = vst [vmem:[#allocation3] sm:$0x3] %v306
        %v308 = vld [vmem:[#allocation4] sm:$0x3]
        %v309 = vadd.f32 %v308, %v294
        %310 = vst [vmem:[#allocation4] sm:$0x3] %v309
        %v311 = vld [vmem:[#allocation5] sm:$0x3]
        %v312 = vadd.f32 %v311, %v295
        %313 = vst [vmem:[#allocation5] sm:$0x3] %v312
        // Predicated region
        $region41: #{tpu_custom_call.1} parent=27 // pred_check
          %p314 = pneg %p222
        $region42: #{tpu_custom_call.1} parent=27 // pred_check_branch
          %316 = sbr.rel (%p314) target = $region44
        $region43: #{tpu_custom_call.1} parent=27 // pred_region
          %v317 = vld [vmem:[#allocation2] sm:$0x3]
          %v318 = vsel %vm297, %v317, 0.0
          %319 = vadd.xlane.f32.xlu0 %v318
          %v320 = vpop.xlane.xlu0 %319
          %v321 = vrot.slane %v320, 4
          %v322 = vadd.f32 %v320, %v321
          %v323 = vrot.slane %v322, 2
          %v324 = vadd.f32 %v322, %v323
          %v325 = vrot.slane %v324, 1
          %v326 = vadd.f32 %v324, %v325
          %s327 = vtos %v326
          %v328 = vstv %s327
          %329 = vst [vmem:[%s221] sm:$0xff] %v328
          %v330 = vld [vmem:[#allocation3] sm:$0x3]
          %v331 = vsel %vm297, %v330, 0.0
          %332 = vadd.xlane.f32.xlu0 %v331
          %v333 = vpop.xlane.xlu0 %332
          %v334 = vrot.slane %v333, 4
          %v335 = vadd.f32 %v333, %v334
          %v336 = vrot.slane %v335, 2
          %v337 = vadd.f32 %v335, %v336
          %v338 = vrot.slane %v337, 1
          %v339 = vadd.f32 %v337, %v338
          %s340 = vtos %v339
          %v341 = vstv %s340
          %s342 = scalar_lea.vmem %s221, 8 [#allocation13]
          %343 = vst [vmem:[%s342] sm:$0xff] %v341
          %v344 = vld [vmem:[#allocation4] sm:$0x3]
          %v345 = vsel %vm297, %v344, 0.0
          %346 = vadd.xlane.f32.xlu0 %v345
          %v347 = vpop.xlane.xlu0 %346
          %v348 = vrot.slane %v347, 4
          %v349 = vadd.f32 %v347, %v348
          %v350 = vrot.slane %v349, 2
          %v351 = vadd.f32 %v349, %v350
          %v352 = vrot.slane %v351, 1
          %v353 = vadd.f32 %v351, %v352
          %s354 = vtos %v353
          %v355 = vstv %s354
          %s356 = scalar_lea.vmem %s221, 16 [#allocation13]
          %357 = vst [vmem:[%s356] sm:$0xff] %v355
          %v358 = vld [vmem:[#allocation5] sm:$0x3]
          %v359 = vsel %vm297, %v358, 0.0
          %360 = vadd.xlane.f32.xlu0 %v359
          %v361 = vpop.xlane.xlu0 %360
          %v362 = vrot.slane %v361, 4
          %v363 = vadd.f32 %v361, %v362
          %v364 = vrot.slane %v363, 2
          %v365 = vadd.f32 %v363, %v364
          %v366 = vrot.slane %v365, 1
          %v367 = vadd.f32 %v365, %v366
          %s368 = vtos %v367
          %v369 = vstv %s368
          %s370 = scalar_lea.vmem %s221, 24 [#allocation13]
          %371 = vst [vmem:[%s370] sm:$0xff] %v369
        $region44: #{tpu_custom_call.1} parent=27 // pred_fallthru
          _
        %s372 = sand.u32 %s100, 1
        %s373 = scalar_lea.sflag [#allocation10], %s372
        %s374 = sand.u32 %s100, 1
        %s375 = smul.addr %s374, 32
        %s376 = scalar_lea.vmem [#allocation13], %s375
        // Predicated region
        $region45: #{tpu_custom_call.1} parent=27 // pred_check
          %p377 = pneg %p110
        $region46: #{tpu_custom_call.1} parent=27 // pred_check_branch
          %379 = sbr.rel (%p377) target = $region48
        $region47: #{tpu_custom_call.1} parent=27 // pred_region
          %s381 = ssub.s32 512, 512
          %382 = vsyncadd %s373, %s381
          %s383 = smul.addr %s28, 4
          %s384 = smul.addr %s383, 128
          %s385 = scalar_lea.hbm %s3, %s384
          %s386 = sshll.u32 %s376, 4
          %s387 = int_to_ptr.vmem [resolvable:$true] %s386
          %392 = dma.vmem_to_hbm [thread:$0]  %s387, 512, %s385, %s373, 128, 128, 8
        $region48: #{tpu_custom_call.1} parent=27 // pred_fallthru
          _
      $region28: #{tpu_custom_call.1} parent=5 // pred_fallthru
        _
      %p393 = scmp.le.s32.totalorder 2, %s19
      // Predicated region
      $region49: #{tpu_custom_call.1} parent=5 // pred_check
        %p394 = pneg %p393
      $region50: #{tpu_custom_call.1} parent=5 // pred_check_branch
        %396 = sbr.rel (%p394) target = $region52
      $region51: #{tpu_custom_call.1} parent=5 // pred_region
        %s397 = ssub.s32 %s19, 2
        // Predicated region
        $region53: #{tpu_custom_call.1} parent=51 // pred_check
          %p398 = pneg %p116
        $region54: #{tpu_custom_call.1} parent=51 // pred_check_branch
          %400 = sbr.rel (%p398) target = $region56
        $region55: #{tpu_custom_call.1} parent=51 // pred_region
          %s401 = sand.u32 %s101, 1
          %s402 = scalar_lea.sflag [#allocation10], %s401
          %s403 = sand.u32 %s101, 1
          %s404 = smul.addr %s403, 32
          %s405 = scalar_lea.vmem [#allocation13], %s404
          %406 = dma.done %s402, 512
        $region56: #{tpu_custom_call.1} parent=51 // pred_fallthru
          _
      $region52: #{tpu_custom_call.1} parent=5 // pred_fallthru
        _
    $region6: #{tpu_custom_call.1} parent=1 // loop_footer
      %s23 = sadd.s32 1, %s19
    $region7: #{tpu_custom_call.1} parent=1 // loop_footer_branch
      %18 = sbr.rel target = $region3
    $region8: #{tpu_custom_call.1} parent=1 // loop_exit
      _
    %407 = vsyncpa [#allocation9], 1
    %s408 = scalar_lea.sflag [#allocation9], 1
    %409 = vsyncpa %s408, 1
    %410 = vsyncpa [#allocation12], 1
    %s411 = scalar_lea.sflag [#allocation12], 1
    %412 = vsyncpa %s411, 1
    %413 = vsyncpa [#allocation10], 1
    %s414 = scalar_lea.sflag [#allocation10], 1
    %415 = vsyncpa %s414, 1

</llo_original>
